<compile_context>
chip_gen: v7x
topology: tpu7x:2x2x1
jax: 0.10.0
libtpu: 0.0.40
codegen_flags: <defaults>
</compile_context>

<pallas_src>
import math
from functools import partial

import numpy as np
import jax
import jax.numpy as jnp
from jax import lax
from jax.experimental import pallas as pl
from jax.experimental.pallas import tpu as pltpu

# ---- RNAQA / IPA hyper-parameters (IPA defaults of the PyTorch module) ------
HIDDEN = 32          # hidden_nf == node_dim == edge_dim == IPA hidden_dim
HEADS = 4            # n_heads
N_QP = 8             # n_query_points
N_VP = 4             # n_value_points
POSITION_SCALE = 10.0
LN_EPS = 1e-5        # torch.nn.LayerNorm default eps

HC = HEADS * HIDDEN          # 128  (all-head channel width)
P3Q = 3 * HEADS * N_QP       # 96   (query-point lanes: x|y|z, (h, p) each)
P3V = 3 * HEADS * N_VP       # 48   (value-point lanes)
KNODE_F = 512                # padded gathered-feature width
# Knode lane layout (all slices start on 128-lane boundaries):
#   [0:128]   k        (h, c)
#   [128:256] v        (h, c)
#   [256:352] k_pts    x(h,p<QP) | y | z
#   [352:384] zero pad
#   [384:432] v_pts    x(h,p>=QP) | y | z
#   [432:512] zero pad


def _clamp_vmem(nbytes):
    try:
        cap = pltpu.get_tpu_info().vmem_capacity_bytes
    except Exception:
        cap = 64 * 1024 * 1024
    return int(min(max(nbytes, 32 * 1024 * 1024), int(cap * 0.9)))


# ---------------------------------------------------------------------------
# Row-tiled "linear (+ optional LayerNorm)" kernel for node/edge embeddings.
# Non-divisible row grids are handled by Pallas block clamping (no jnp.pad).
# ---------------------------------------------------------------------------
def _linear_ln_kernel(x_ref, w_ref, b_ref, g_ref, beta_ref, o_ref, *, apply_ln):
    x = x_ref[...].astype(jnp.float32)
    y = jnp.dot(x, w_ref[...], preferred_element_type=jnp.float32) + b_ref[...]
    if apply_ln:
        mu = jnp.mean(y, axis=-1, keepdims=True)
        var = jnp.mean((y - mu) ** 2, axis=-1, keepdims=True)
        y = (y - mu) * lax.rsqrt(var + LN_EPS) * g_ref[...] + beta_ref[...]
    o_ref[...] = y.astype(o_ref.dtype)


def linear_ln(x2d, W, b, g=None, beta=None, row_tile=1024):
    M, fin = x2d.shape
    fout = W.shape[1]
    apply_ln = g is not None
    if g is None:
        g = jnp.ones((1, fout), jnp.float32)
        beta = jnp.zeros((1, fout), jnp.float32)
    TM = max(8, min(row_tile, ((M + 7) // 8) * 8))
    return pl.pallas_call(
        partial(_linear_ln_kernel, apply_ln=apply_ln),
        grid=(pl.cdiv(M, TM),),
        in_specs=[pl.BlockSpec((TM, fin), lambda i: (i, 0)),
                  pl.BlockSpec((fin, fout), lambda i: (0, 0)),
                  pl.BlockSpec((1, fout), lambda i: (0, 0)),
                  pl.BlockSpec((1, fout), lambda i: (0, 0)),
                  pl.BlockSpec((1, fout), lambda i: (0, 0))],
        out_specs=pl.BlockSpec((TM, fout), lambda i: (i, 0)),
        out_shape=jax.ShapeDtypeStruct((M, fout), jnp.float32),
        compiler_params=pltpu.CompilerParams(dimension_semantics=("parallel",)),
    )(x2d, W, b, g, beta)


# ---------------------------------------------------------------------------
# Per-layer key/value-side precompute: Knode [B, N, 512] bf16 (runs once per
# layer over the batch grid -- hoisted out of the per-query-tile kernel).
# ---------------------------------------------------------------------------
def _knode_kernel(hv_ref, rt_ref, kslab_ref, kbias_ref, out_ref):
    f32 = jnp.float32
    H, C, QP, VP = HEADS, HIDDEN, N_QP, N_VP
    KVW = 2 * H * C                      # 256
    PW = 3 * H * (QP + VP)               # 144
    NPT = H * (QP + VP)                  # 48 per component
    HQ = H * QP                          # 32
    HV = H * VP                          # 16

    hv16 = hv_ref[...].astype(jnp.bfloat16)                       # [T, 32]
    kslab = kslab_ref[...]                                        # bf16 [32, 400]
    kbias = kbias_ref[...].astype(f32)                            # [1, 400]

    kv = jnp.dot(hv16, kslab[:, 0:KVW],
                 preferred_element_type=f32) + kbias[:, 0:KVW]          # [T, 256]
    kvp = jnp.dot(hv16, kslab[:, KVW:KVW + PW],
                  preferred_element_type=f32) + kbias[:, KVW:KVW + PW]  # [T, 144]

    rt = rt_ref[...].astype(f32)                                  # [T, 12]
    R00, R01, R02 = rt[:, 0:1], rt[:, 1:2], rt[:, 2:3]
    R10, R11, R12 = rt[:, 3:4], rt[:, 4:5], rt[:, 5:6]
    R20, R21, R22 = rt[:, 6:7], rt[:, 7:8], rt[:, 8:9]
    tx, ty, tz = rt[:, 9:10], rt[:, 10:11], rt[:, 11:12]

    X_, Y_, Z_ = kvp[:, 0:NPT], kvp[:, NPT:2 * NPT], kvp[:, 2 * NPT:3 * NPT]
    gX = R00 * X_ + R01 * Y_ + R02 * Z_ + tx                      # [T, 48]
    gY = R10 * X_ + R11 * Y_ + R12 * Z_ + ty
    gZ = R20 * X_ + R21 * Y_ + R22 * Z_ + tz

    T = kv.shape[0]
    z32 = jnp.zeros((T, 32), f32)
    z80 = jnp.zeros((T, 80), f32)
    knode = jnp.concatenate(
        [kv,
         gX[:, 0:HQ], gY[:, 0:HQ], gZ[:, 0:HQ], z32,
         gX[:, HQ:HQ + HV], gY[:, HQ:HQ + HV], gZ[:, HQ:HQ + HV], z80], axis=-1)
    out_ref[...] = knode.astype(out_ref.dtype)


def knode_precompute(hV, Rt, lw):
    B, Np, D = hV.shape
    vmem = _clamp_vmem(4 * (Np * (D + 12) * 4 + Np * KNODE_F * 2)
                       + 4 * (D * 400 * 2 + 400 * 4) + (8 << 20))
    return pl.pallas_call(
        _knode_kernel,
        grid=(B,),
        in_specs=[pl.BlockSpec((None, Np, D), lambda b: (b, 0, 0)),
                  pl.BlockSpec((None, Np, 12), lambda b: (b, 0, 0)),
                  pl.BlockSpec((D, 400), lambda b: (0, 0)),
                  pl.BlockSpec((1, 400), lambda b: (0, 0))],
        out_specs=pl.BlockSpec((None, Np, KNODE_F), lambda b: (b, 0, 0)),
        out_shape=jax.ShapeDtypeStruct((B, Np, KNODE_F), jnp.bfloat16),
        compiler_params=pltpu.CompilerParams(
            dimension_semantics=("parallel",), vmem_limit_bytes=vmem),
    )(hV, Rt, lw['kslab'], lw['kbias'])


# ---------------------------------------------------------------------------
# IPA attention + residual LayerNorm + MLP + LayerNorm (+ optional fused
# output projection on the final layer).  Grid = (batch, query-row tile).
# ---------------------------------------------------------------------------
def _ipa_attn_kernel(knode_ref, hv_ref, rt_ref, he_ref, eidx_ref,
                     aslab_ref, bslab_ref, wlog_ref, bias_ref,
                     eall_ref, rep_ref, out_ref,
                     *, Np, K, TN, OUT_NF, emit_pred):
    f32 = jnp.float32
    bf16 = jnp.bfloat16
    D, H, QP, VP = HIDDEN, HEADS, N_QP, N_VP
    HQ, HV = H * QP, H * VP

    def mm(a, b):
        return jnp.dot(a, b, preferred_element_type=f32)

    aslab = aslab_ref[...]                       # bf16 [32, 512]
    bslab = bslab_ref[...]                       # bf16 [448, 32]
    bias = bias_ref[...].astype(f32)             # f32  [8, 128]
    wlog = wlog_ref[...].astype(f32)             # f32  [256, 4]

    # ----- query-side projections for this row tile --------------------------
    hv = hv_ref[...].astype(f32)                 # [TN, D]
    hv16 = hv.astype(bf16)
    rt = rt_ref[...].astype(f32)                 # [TN, 12] = R(row-major) | t

    q = mm(hv16, aslab[:, 0:HC]) + bias[0:1, 0:HC]                # c_qk folded in
    qp = mm(hv16, aslab[:, HC:HC + P3Q]) + bias[1:2, 0:P3Q]       # [TN, 96]

    R00, R01, R02 = rt[:, 0:1], rt[:, 1:2], rt[:, 2:3]
    R10, R11, R12 = rt[:, 3:4], rt[:, 4:5], rt[:, 5:6]
    R20, R21, R22 = rt[:, 6:7], rt[:, 7:8], rt[:, 8:9]
    tx, ty, tz = rt[:, 9:10], rt[:, 10:11], rt[:, 11:12]

    qx, qy, qz = qp[:, 0:HQ], qp[:, HQ:2 * HQ], qp[:, 2 * HQ:3 * HQ]
    gqx = R00 * qx + R01 * qy + R02 * qz + tx
    gqy = R10 * qx + R11 * qy + R12 * qz + ty
    gqz = R20 * qx + R21 * qy + R22 * qz + tz
    gq = jnp.concatenate([gqx, gqy, gqz], axis=-1)                # [TN, 96]

    # ----- one-hot neighbour gather: single bf16 MXU matmul -------------------
    # TODO(synk): sentinel / padded neighbour indices (<0 or >=N) gather zeros
    # instead of wrapping like torch.gather; real batched inputs would need an
    # additive -inf mask on padded K slots.
    eidx = eidx_ref[...].reshape(K * TN, 1)                       # int32
    onehot = (eidx == lax.broadcasted_iota(jnp.int32, (K * TN, Np), 1)).astype(bf16)
    gat = mm(onehot, knode_ref[...])                              # f32 [K*TN, 512]
    gat3 = gat.reshape(K, TN, KNODE_F)

    hE = he_ref[...].astype(f32)                                  # [K, TN, D]
    hE2 = hE.reshape(K * TN, D)

    # ----- logits for all heads via three selector matmuls --------------------
    # NOTE: the softmax-invariant c3*|q_pts|^2 term (constant over neighbours)
    # is dropped -- identical forward semantics.
    qkP = (q[None, :, :] * gat3[:, :, 0:HC]).reshape(K * TN, HC)
    kq_pts = gat3[:, :, 2 * HC:2 * HC + P3Q]
    ptP = (kq_pts * (kq_pts - 2.0 * gq[None, :, :])).reshape(K * TN, P3Q)
    logits = (mm(qkP, wlog[0:HC, :])
              + mm(ptP, wlog[HC:HC + P3Q, :])
              + mm(hE2, wlog[HC + P3Q:HC + P3Q + D, :])
              + bias[3:4, 0:H])                                   # [K*TN, H]
    logits3 = logits.reshape(K, TN, H)

    # softmax over neighbours (leading axis -> cross-vreg VPU reductions)
    mx = jnp.max(logits3, axis=0, keepdims=True)
    e = jnp.exp(logits3 - mx)
    a3 = e * pl.reciprocal(jnp.sum(e, axis=0, keepdims=True), approx=True)

    # ----- weighted sums: broadcast attention over lanes with one matmul ------
    aexp = mm(a3.reshape(K * TN, H), eall_ref[...])               # [K*TN, 384]
    aexp3 = aexp.reshape(K, TN, 384)
    hE_rep = mm(hE2, rep_ref[...]).reshape(K, TN, HC)             # hE repeated / head

    o = jnp.sum(aexp3[:, :, 0:HC] * gat3[:, :, HC:2 * HC], axis=0)               # [TN,128]
    wvp = jnp.sum(aexp3[:, :, HC:HC + P3V] * gat3[:, :, 384:384 + P3V], axis=0)  # [TN,48]
    o_pair = jnp.sum(aexp3[:, :, 256:256 + HC] * hE_rep, axis=0)                 # [TN,128]

    # invert-apply with node i's frame:  p_local = R^T (p_global - t)
    gvx, gvy, gvz = wvp[:, 0:HV], wvp[:, HV:2 * HV], wvp[:, 2 * HV:3 * HV]
    dx, dy, dz = gvx - tx, gvy - ty, gvz - tz
    lx = R00 * dx + R10 * dy + R20 * dz
    ly = R01 * dx + R11 * dy + R21 * dz
    lz = R02 * dx + R12 * dy + R22 * dz
    nrm = jnp.sqrt(lx * lx + ly * ly + lz * lz + 1e-8)

    # linear_out as one 320-deep bf16 matmul (torch concat order)
    cat = jnp.concatenate([o, lx, ly, lz, nrm, o_pair], axis=-1).astype(bf16)
    s = mm(cat, bslab[0:320, :]) + bias[4:5, 0:D]

    def layer_norm(x, g, b):
        mu = jnp.mean(x, axis=-1, keepdims=True)
        var = jnp.mean((x - mu) ** 2, axis=-1, keepdims=True)
        return (x - mu) * lax.rsqrt(var + LN_EPS) * g + b

    # TODO(synk): nn.Dropout layers are identity (inference semantics).
    x1 = layer_norm(hv + s, bias[6:7, 0:D], bias[6:7, D:2 * D])
    h1 = jnp.maximum(mm(x1.astype(bf16), aslab[:, 256:384]) + bias[2:3, :], 0.0)
    m = mm(h1.astype(bf16), bslab[320:448, :]) + bias[5:6, 0:D]
    x2 = layer_norm(x1 + m, bias[6:7, 2 * D:3 * D], bias[6:7, 3 * D:4 * D])

    if emit_pred:   # fused final output projection (last layer only)
        pred = mm(x2.astype(bf16), aslab[:, 384:384 + OUT_NF]) + bias[7:8, 0:OUT_NF]
        out_ref[...] = pred.astype(out_ref.dtype)
    else:
        out_ref[...] = x2.astype(out_ref.dtype)


def _ipa_vmem_bytes(Np, K, TN):
    n_pairs = K * TN
    b = 2 * Np * KNODE_F * 2                           # Knode block (dbl-buffered)
    b += 2 * K * TN * (HIDDEN * 4 + 4)                 # hE + E_idx tiles
    b += n_pairs * Np * 2                              # one-hot (bf16)
    b += n_pairs * KNODE_F * 4                         # gathered features (f32)
    b += n_pairs * (384 + HC + P3Q + HC + HIDDEN) * 4  # aexp / qkP / ptP / hE_rep
    b += TN * 4096 * 4                                 # per-row temporaries
    b += 4 * (32 * 512 * 2 + 448 * 32 * 2 + 256 * 4 * 4
              + 8 * 128 * 4 + 4 * 384 * 4 + 32 * 128 * 4)   # weight slabs
    b += 4 * TN * (HIDDEN + 12) * 4                    # hv / rt / out tiles
    return b + (8 << 20)


def ipa_layer(hV, hE_T, Eidx_T, Rt, knode, consts, lw, *, TN, final_out_nf=None):
    B, Np, D = hV.shape
    K = hE_T.shape[1]
    QT = Np // TN
    emit_pred = final_out_nf is not None
    out_nf = final_out_nf if emit_pred else D
    e_all, rep = consts
    kernel = partial(_ipa_attn_kernel, Np=Np, K=K, TN=TN,
                     OUT_NF=(final_out_nf or 0), emit_pred=emit_pred)
    vmem = _clamp_vmem(_ipa_vmem_bytes(Np, K, TN))
    return pl.pallas_call(
        kernel,
        grid=(B, QT),
        in_specs=[pl.BlockSpec((None, Np, KNODE_F), lambda b, qt: (b, 0, 0)),
                  pl.BlockSpec((None, TN, D), lambda b, qt: (b, qt, 0)),
                  pl.BlockSpec((None, TN, 12), lambda b, qt: (b, qt, 0)),
                  pl.BlockSpec((None, K, TN, D), lambda b, qt: (b, 0, qt, 0)),
                  pl.BlockSpec((None, K, TN, 1), lambda b, qt: (b, 0, qt, 0)),
                  pl.BlockSpec((D, 512), lambda b, qt: (0, 0)),
                  pl.BlockSpec((448, D), lambda b, qt: (0, 0)),
                  pl.BlockSpec((256, HEADS), lambda b, qt: (0, 0)),
                  pl.BlockSpec((8, 128), lambda b, qt: (0, 0)),
                  pl.BlockSpec((HEADS, 384), lambda b, qt: (0, 0)),
                  pl.BlockSpec((D, HC), lambda b, qt: (0, 0))],
        out_specs=pl.BlockSpec((None, TN, out_nf), lambda b, qt: (b, qt, 0)),
        out_shape=jax.ShapeDtypeStruct((B, Np, out_nf), jnp.float32),
        compiler_params=pltpu.CompilerParams(
            dimension_semantics=("parallel", "parallel"),
            vmem_limit_bytes=vmem),
    )(knode, hV, Rt, hE_T, Eidx_T,
      lw['aslab'], lw['bslab'], lw['wlog'], lw['bias'], e_all, rep)


# ---------------------------------------------------------------------------
# Host-side weight packing / derived selector matrices (once per layer).
# ---------------------------------------------------------------------------
def _perm_kv():
    perm = []
    for h in range(HEADS):
        for c in range(HIDDEN):
            perm.append(h * 2 * HIDDEN + c)               # k block
    for h in range(HEADS):
        for c in range(HIDDEN):
            perm.append(h * 2 * HIDDEN + HIDDEN + c)      # v block
    return np.asarray(perm, np.int32)


def _perm_kvp():
    npts = N_QP + N_VP
    perm = []
    for comp in range(3):
        for h in range(HEADS):
            for p in range(N_QP):
                perm.append(comp * HEADS * npts + h * npts + p)        # query pts
        for h in range(HEADS):
            for p in range(N_QP, npts):
                perm.append(comp * HEADS * npts + h * npts + p)        # value pts
    return np.asarray(perm, np.int32)


def _make_consts():
    H, C, D, VP = HEADS, HIDDEN, HIDDEN, N_VP
    e_all = np.zeros((H, 384), np.float32)
    rep = np.zeros((D, H * D), np.float32)
    for h in range(H):
        e_all[h, h * C:(h + 1) * C] = 1.0                      # value channels
        for comp in range(3):
            base = 128 + comp * H * VP + h * VP
            e_all[h, base:base + VP] = 1.0                     # value points
        e_all[h, 256 + h * D:256 + (h + 1) * D] = 1.0          # pair (edge) lanes
        rep[np.arange(D), h * D + np.arange(D)] = 1.0
    return jnp.asarray(e_all), jnp.asarray(rep)


def _prep_layer(lp, final=None):
    f32 = jnp.float32
    D, H, C, QP = HIDDEN, HEADS, HIDDEN, N_QP
    c_qk = math.sqrt(1.0 / (3.0 * C))
    c_b = math.sqrt(1.0 / 3.0)
    c_pt = math.sqrt(1.0 / (3.0 * (QP * 9.0 / 2.0)))
    c3 = -0.5 * c_pt * jnp.logaddexp(lp['hw'].astype(f32), 0.0)    # stable softplus

    # logits selector slab: [head-sum(qk) | point-distance | edge-bias] rows
    s_hsum = np.zeros((H * C, H), np.float32)
    m_pt = np.zeros((3 * H * QP, H), np.float32)
    for h in range(H):
        s_hsum[h * C:(h + 1) * C, h] = 1.0
        for comp in range(3):
            m_pt[comp * H * QP + h * QP: comp * H * QP + (h + 1) * QP, h] = 1.0
    wlog = jnp.concatenate([jnp.asarray(s_hsum),
                            jnp.asarray(m_pt) * c3,
                            c_b * lp['wb'].astype(f32)], axis=0)   # [256, 4]

    aslab = jnp.zeros((D, 512), f32)
    aslab = aslab.at[:, 0:HC].set(lp['wq'].astype(f32) * c_qk)
    aslab = aslab.at[:, HC:HC + P3Q].set(lp['wqp'].astype(f32))
    aslab = aslab.at[:, 256:384].set(lp['w1'].astype(f32))
    if final is not None:
        ow, _ = final
        assert ow.shape[1] <= 128
        aslab = aslab.at[:, 384:384 + ow.shape[1]].set(ow.astype(f32))
    aslab = aslab.astype(jnp.bfloat16)

    bslab = jnp.concatenate([lp['wout'], lp['w2']], axis=0).astype(jnp.bfloat16)

    def _row(v):
        r = jnp.zeros((1, 128), f32)
        return r.at[:, :v.shape[1]].set(v.astype(f32))

    rows = [_row(lp['bq'] * c_qk), _row(lp['bqp']), _row(lp['b1']),
            _row(lp['bb'] * c_b), _row(lp['bout']), _row(lp['b2']),
            jnp.concatenate([lp['g0'], lp['be0'], lp['g1'], lp['be1']],
                            axis=-1).astype(f32),
            _row(final[1]) if final is not None else jnp.zeros((1, 128), f32)]
    bias = jnp.concatenate(rows, axis=0)                           # [8, 128]

    pkv = jnp.asarray(_perm_kv())
    pkvp = jnp.asarray(_perm_kvp())
    kslab = jnp.concatenate([lp['wkv'][:, pkv], lp['wkvp'][:, pkvp]],
                            axis=1).astype(jnp.bfloat16)           # [32, 400]
    kbias = jnp.concatenate([lp['bkv'][:, pkv], lp['bkvp'][:, pkvp]],
                            axis=1).astype(f32)                    # [1, 400]

    return dict(aslab=aslab, bslab=bslab, wlog=wlog, bias=bias,
                kslab=kslab, kbias=kbias)


# ---------------------------------------------------------------------------
# Backbone frames (AF2 rigidFrom3Points with origin at the middle atom).
# ---------------------------------------------------------------------------
def rigid_from_three_points(x1, x2, x3, eps=1e-8):
    v1 = x3 - x2
    v2 = x1 - x2
    e1 = v1 / (jnp.linalg.norm(v1, axis=-1, keepdims=True) + eps)
    u2 = v2 - e1 * jnp.sum(e1 * v2, axis=-1, keepdims=True)
    e2 = u2 / (jnp.linalg.norm(u2, axis=-1, keepdims=True) + eps)
    e3 = jnp.cross(e1, e2, axis=-1)
    R = jnp.stack([e1, e2, e3], axis=-1)     # columns e1, e2, e3
    return R, x2


def _row_tiling(N):
    Np = ((N + 7) // 8) * 8
    if Np <= 256:
        return Np, Np
    TN = 128
    Np = ((N + TN - 1) // TN) * TN
    return Np, TN


# ---------------------------------------------------------------------------
# Full RNAQA forward
# ---------------------------------------------------------------------------
def rnaqa_forward(params, V, E, E_idx, X):
    B, N, _ = V.shape
    K = E_idx.shape[-1]
    D = HIDDEN
    out_nf = params['out_w'].shape[1]
    n_layers = len(params['layers'])

    Np, TN = _row_tiling(N)
    if Np != N:
        pad = Np - N
        V = jnp.pad(V, ((0, 0), (0, pad), (0, 0)))
        E = jnp.pad(E, ((0, 0), (0, pad), (0, 0), (0, 0)))
        E_idx = jnp.pad(E_idx, ((0, 0), (0, pad), (0, 0)))
        X = jnp.pad(X, ((0, 0), (0, pad), (0, 0), (0, 0)))

    hV = linear_ln(V.reshape(B * Np, -1), params['node_w'], params['node_b'],
                   params['ln_nodes_g'], params['ln_nodes_b']).reshape(B, Np, D)
    hE = linear_ln(E.reshape(B * Np * K, -1), params['edge_w'], params['edge_b'],
                   params['ln_edges_g'], params['ln_edges_b']).reshape(B, Np, K, D)

    # Layer-invariant restructuring hoisted out of the per-layer kernels.
    hE_T = jnp.transpose(hE, (0, 2, 1, 3))                           # [B, K, Np, D]
    Eidx_T = jnp.transpose(E_idx, (0, 2, 1))[..., None].astype(jnp.int32)

    Xs = X / POSITION_SCALE
    R, t = rigid_from_three_points(Xs[..., 0, :], Xs[..., 1, :], Xs[..., 2, :])
    Rt = jnp.concatenate([R.reshape(B, Np, 9), t], axis=-1)          # [B, Np, 12]

    consts = _make_consts()
    pred = None
    for li, lp in enumerate(params['layers']):
        is_last = li == n_layers - 1
        lw = _prep_layer(lp, final=(params['out_w'], params['out_b'])
                         if is_last else None)
        knode = knode_precompute(hV, Rt, lw)
        if is_last:
            pred = ipa_layer(hV, hE_T, Eidx_T, Rt, knode, consts, lw,
                             TN=TN, final_out_nf=out_nf)
        else:
            hV = ipa_layer(hV, hE_T, Eidx_T, Rt, knode, consts, lw, TN=TN)
    return pred[:, :N, :]


# ---------------------------------------------------------------------------
# Deterministic synthetic parameter init (shapes from the module __init__),
# weights stored in [in, out] layout.
# ---------------------------------------------------------------------------
def init_params(key, in_node_nf, in_edge_nf, out_node_nf, n_layers):
    D, H, C, QP, VP = HIDDEN, HEADS, HIDDEN, N_QP, N_VP
    keys = iter(jax.random.split(key, 256))

    def lin(fan_in, fan_out):
        bound = 1.0 / math.sqrt(fan_in)
        W = jax.random.uniform(next(keys), (fan_in, fan_out), jnp.float32, -bound, bound)
        b = jax.random.uniform(next(keys), (1, fan_out), jnp.float32, -bound, bound)
        return W, b

    p = {}
    p['node_w'], p['node_b'] = lin(in_node_nf, D)
    p['ln_nodes_g'] = jnp.ones((1, D), jnp.float32)
    p['ln_nodes_b'] = jnp.zeros((1, D), jnp.float32)
    p['edge_w'], p['edge_b'] = lin(in_edge_nf, D)
    p['ln_edges_g'] = jnp.ones((1, D), jnp.float32)
    p['ln_edges_b'] = jnp.zeros((1, D), jnp.float32)

    out_dim = H * (D + C + 4 * VP)                       # 320
    layers = []
    for _ in range(n_layers):
        lp = {}
        lp['wq'], lp['bq'] = lin(D, H * C)
        lp['wkv'], lp['bkv'] = lin(D, 2 * H * C)
        lp['wqp'], lp['bqp'] = lin(D, H * QP * 3)
        lp['wkvp'], lp['bkvp'] = lin(D, H * (QP + VP) * 3)
        lp['wb'], lp['bb'] = lin(D, H)
        lp['hw'] = jnp.full((1, H), 0.541324854612918, jnp.float32)   # softplus(.) == 1
        lp['wout'], lp['bout'] = lin(out_dim, D)
        lp['g0'] = jnp.ones((1, D), jnp.float32)
        lp['be0'] = jnp.zeros((1, D), jnp.float32)
        lp['w1'], lp['b1'] = lin(D, 4 * D)
        lp['w2'], lp['b2'] = lin(4 * D, D)
        lp['g1'] = jnp.ones((1, D), jnp.float32)
        lp['be1'] = jnp.zeros((1, D), jnp.float32)
        layers.append(lp)
    p['layers'] = layers
    p['out_w'], p['out_b'] = lin(D, out_node_nf)
    return p


if __name__ == "__main__":
    key = jax.random.PRNGKey(0)
    B, N, K = 2, 8, 4                     # batch, nucleotides, k_neighbors
    in_node_nf, in_edge_nf, out_node_nf, n_layers = 10, 12, 1, 4

    k1, k2, k3, k4, kp = jax.random.split(key, 5)
    V = jax.random.normal(k1, (B, N, in_node_nf), jnp.float32)
    E = jax.random.normal(k2, (B, N, K, in_edge_nf), jnp.float32)
    E_idx = jax.random.randint(k3, (B, N, K), 0, N, jnp.int32)
    X = jax.random.normal(k4, (B, N, 3, 3), jnp.float32) * 5.0   # P, C4', N coords

    params = init_params(kp, in_node_nf, in_edge_nf, out_node_nf, n_layers)
    out = rnaqa_forward(params, V, E, E_idx, X)
    jax.block_until_ready(out)
    assert out.shape == (B, N, out_node_nf)
    print("KERNEL_OK")
</pallas_src>

<mosaic_0001>
module attributes {stable_mosaic.version = 11 : i64} {
  func.func @_linear_ln_kernel(%arg0: i32, %arg1: memref<16x10xf32, #tpu.memory_space<vmem>>, %arg2: memref<10x32xf32, #tpu.memory_space<vmem>>, %arg3: memref<1x32xf32, #tpu.memory_space<vmem>>, %arg4: memref<1x32xf32, #tpu.memory_space<vmem>>, %arg5: memref<1x32xf32, #tpu.memory_space<vmem>>, %arg6: memref<16x32xf32, #tpu.memory_space<vmem>>) attributes {dimension_semantics = [#tpu.dimension_semantics<parallel>], iteration_bounds = array<i64: 1>, scalar_prefetch = 0 : i64, scratch_operands = 0 : i64, tpu.core_type = #tpu.core_type<tc>, window_params = [{transform_indices = @transform_0, window_bounds = array<i64: 16, 10>}, {pipeline_mode = #tpu.pipeline_mode<synchronous>, transform_indices = @transform_1, window_bounds = array<i64: 10, 32>}, {pipeline_mode = #tpu.pipeline_mode<synchronous>, transform_indices = @transform_2, window_bounds = array<i64: 1, 32>}, {pipeline_mode = #tpu.pipeline_mode<synchronous>, transform_indices = @transform_3, window_bounds = array<i64: 1, 32>}, {pipeline_mode = #tpu.pipeline_mode<synchronous>, transform_indices = @transform_4, window_bounds = array<i64: 1, 32>}, {transform_indices = @transform_5, window_bounds = array<i64: 16, 32>}]} {
    %c0 = arith.constant 0 : index
    %c0_0 = arith.constant 0 : index
    %0 = vector.load %arg1[%c0, %c0_0] : memref<16x10xf32, #tpu.memory_space<vmem>>, vector<16x10xf32>
    %c0_1 = arith.constant 0 : index
    %c0_2 = arith.constant 0 : index
    %1 = vector.load %arg2[%c0_1, %c0_2] : memref<10x32xf32, #tpu.memory_space<vmem>>, vector<10x32xf32>
    %cst = arith.constant dense<0.000000e+00> : vector<16x32xf32>
    %2 = tpu.matmul %0, %1, %cst {dimension_numbers = #tpu.dot_dimension_numbers<[1], [0], [0], [1], [0, 0, 1, 1], [], []>} : vector<16x10xf32>, vector<10x32xf32>, vector<16x32xf32> -> vector<16x32xf32>
    %c0_3 = arith.constant 0 : index
    %c0_4 = arith.constant 0 : index
    %3 = vector.load %arg3[%c0_3, %c0_4] : memref<1x32xf32, #tpu.memory_space<vmem>>, vector<1x32xf32>
    %4 = vector.broadcast %3 : vector<1x32xf32> to vector<16x32xf32>
    %5 = arith.addf %2, %4 : vector<16x32xf32>
    %cst_5 = arith.constant dense<0.000000e+00> : vector<16xf32>
    %6 = vector.multi_reduction <add>, %5, %cst_5 [1] : vector<16x32xf32> to vector<16xf32>
    %7 = vector.shape_cast %6 : vector<16xf32> to vector<16x1xf32>
    %cst_6 = arith.constant 3.200000e+01 : f32
    %8 = vector.broadcast %cst_6 : f32 to vector<16x1xf32>
    %9 = arith.divf %7, %8 : vector<16x1xf32>
    %10 = vector.broadcast %9 : vector<16x1xf32> to vector<16x32xf32>
    %11 = arith.subf %5, %10 : vector<16x32xf32>
    %12 = arith.mulf %11, %11 : vector<16x32xf32>
    %cst_7 = arith.constant dense<0.000000e+00> : vector<16xf32>
    %13 = vector.multi_reduction <add>, %12, %cst_7 [1] : vector<16x32xf32> to vector<16xf32>
    %14 = vector.shape_cast %13 : vector<16xf32> to vector<16x1xf32>
    %cst_8 = arith.constant 3.200000e+01 : f32
    %15 = vector.broadcast %cst_8 : f32 to vector<16x1xf32>
    %16 = arith.divf %14, %15 : vector<16x1xf32>
    %17 = vector.broadcast %9 : vector<16x1xf32> to vector<16x32xf32>
    %18 = arith.subf %5, %17 : vector<16x32xf32>
    %cst_9 = arith.constant 9.99999974E-6 : f32
    %19 = vector.broadcast %cst_9 : f32 to vector<16x1xf32>
    %20 = arith.addf %16, %19 : vector<16x1xf32>
    %21 = math.rsqrt %20 : vector<16x1xf32>
    %22 = vector.broadcast %21 : vector<16x1xf32> to vector<16x32xf32>
    %23 = arith.mulf %18, %22 : vector<16x32xf32>
    %c0_10 = arith.constant 0 : index
    %c0_11 = arith.constant 0 : index
    %24 = vector.load %arg4[%c0_10, %c0_11] : memref<1x32xf32, #tpu.memory_space<vmem>>, vector<1x32xf32>
    %25 = vector.broadcast %24 : vector<1x32xf32> to vector<16x32xf32>
    %26 = arith.mulf %23, %25 : vector<16x32xf32>
    %c0_12 = arith.constant 0 : index
    %c0_13 = arith.constant 0 : index
    %27 = vector.load %arg5[%c0_12, %c0_13] : memref<1x32xf32, #tpu.memory_space<vmem>>, vector<1x32xf32>
    %28 = vector.broadcast %27 : vector<1x32xf32> to vector<16x32xf32>
    %29 = arith.addf %26, %28 : vector<16x32xf32>
    %c0_14 = arith.constant 0 : index
    %c0_15 = arith.constant 0 : index
    %30 = vector.load %arg6[%c0_14, %c0_15] : memref<16x32xf32, #tpu.memory_space<vmem>>, vector<16x32xf32>
    tpu.vector_store %arg6[%c0_14, %c0_15], %29 {strides = array<i32>} : memref<16x32xf32, #tpu.memory_space<vmem>>, vector<16x32xf32>,
    return
  }
  func.func @transform_0(%arg0: i32) -> (i32, i32) {
    %c0_i32 = arith.constant 0 : i32
    %c0_i32_0 = arith.constant 0 : i32
    return %arg0, %c0_i32 : i32, i32
  }
  func.func @transform_1(%arg0: i32) -> (i32, i32) {
    %c0_i32 = arith.constant 0 : i32
    %c0_i32_0 = arith.constant 0 : i32
    %c0_i32_1 = arith.constant 0 : i32
    return %c0_i32, %c0_i32_0 : i32, i32
  }
  func.func @transform_2(%arg0: i32) -> (i32, i32) {
    %c0_i32 = arith.constant 0 : i32
    %c0_i32_0 = arith.constant 0 : i32
    %c0_i32_1 = arith.constant 0 : i32
    return %c0_i32, %c0_i32_0 : i32, i32
  }
  func.func @transform_3(%arg0: i32) -> (i32, i32) {
    %c0_i32 = arith.constant 0 : i32
    %c0_i32_0 = arith.constant 0 : i32
    %c0_i32_1 = arith.constant 0 : i32
    return %c0_i32, %c0_i32_0 : i32, i32
  }
  func.func @transform_4(%arg0: i32) -> (i32, i32) {
    %c0_i32 = arith.constant 0 : i32
    %c0_i32_0 = arith.constant 0 : i32
    %c0_i32_1 = arith.constant 0 : i32
    return %c0_i32, %c0_i32_0 : i32, i32
  }
  func.func @transform_5(%arg0: i32) -> (i32, i32) {
    %c0_i32 = arith.constant 0 : i32
    %c0_i32_0 = arith.constant 0 : i32
    return %arg0, %c0_i32 : i32, i32
  }
}

</mosaic_0001>

<llo_original>
// kernel: tpu_custom_call.1
$region0: #{tpu_custom_call.1}
  #allocation0 [shape = 'u32[]', space=smem, size = 0x4, offset = 0x4, fixed_abs, tag = 'smem constant byte address 0x4 - core index']
  #allocation1 [shape = 'u32[144,128]{1,0:T(1,128)}', space=vmem, size = 0x12000, scoped, tag = 'internal scratch']
  %s0 = inlined_call_operand.hbm [shape: f32[16,10], index: 0, kind: input, shape index: {}]
  %s1 = inlined_call_operand.hbm [shape: f32[10,32], index: 1, kind: input, shape index: {}]
  %s2 = inlined_call_operand.vmem [shape: f32[1,32], index: 2, kind: input, shape index: {}]
  %s3 = inlined_call_operand.vmem [shape: f32[1,32], index: 3, kind: input, shape index: {}]
  %s4 = inlined_call_operand.vmem [shape: f32[1,32], index: 4, kind: input, shape index: {}]
  %s5 = inlined_call_operand.hbm [shape: f32[16,32], index: 5, kind: output, shape index: {}]
  %s6 = sld [smem:[#allocation0]]
  $region38: #{tpu_custom_call.1} parent=0
    _
  %s8 = ssub.s32 1, %s6
  %s9 = scalar_select 0, %s8, %s6
  $region1: #{tpu_custom_call.1} parent=0
    #allocation2 [shape = 'u8[8192]{0}', space=vmem, size = 0x2000, scoped, tag = 'input window, operand 0, single buffered']
    #allocation3 [shape = 's32[1]{0}', space=sflag, size = 0x4, scoped, tag = 'scoped memory for tpu_custom_call.1']
    #allocation4 [shape = 's32[1]{0}', space=sflag, size = 0x4, scoped, tag = 'scoped memory for tpu_custom_call.1']
    #allocation5 [shape = 'u8[8192]{0}', space=vmem, size = 0x2000, scoped, tag = 'input window, operand 1, single buffered']
    #allocation6 [shape = 's32[1]{0}', space=sflag, size = 0x4, scoped, tag = 'scoped memory for tpu_custom_call.1']
    #allocation7 [shape = 'u8[8192]{0}', space=vmem, size = 0x2000, scoped, tag = 'output window, operand 0, single buffered']
    %10 = vsyncpa [#allocation3], 0
    %11 = vsyncpa [#allocation6], 0
    %12 = vsyncpa [#allocation4], 0
    // Predicated region
    $region2: #{tpu_custom_call.1} parent=1 // pred_check
      _
    $region3: #{tpu_custom_call.1} parent=1 // pred_check_branch
      %14 = sbr.rel (0) target = $region5
    $region4: #{tpu_custom_call.1} parent=1 // pred_region
      %s16 = ssub.s32 256, 256
      %17 = vsyncadd [#allocation3], %s16
      %s18 = sshll.u32 [#allocation2], 4
      %s19 = int_to_ptr.vmem [resolvable:$true] %s18
      %24 = dma.hbm_to_vmem [thread:$0]  %s0, 256, %s19, [#allocation3], 128, 128, 8
    $region5: #{tpu_custom_call.1} parent=1 // pred_fallthru
      _
    // Predicated region
    $region6: #{tpu_custom_call.1} parent=1 // pred_check
      _
    $region7: #{tpu_custom_call.1} parent=1 // pred_check_branch
      %26 = sbr.rel (0) target = $region9
    $region8: #{tpu_custom_call.1} parent=1 // pred_region
      %s28 = ssub.s32 256, 256
      %29 = vsyncadd [#allocation6], %s28
      %s30 = sshll.u32 [#allocation5], 4
      %s31 = int_to_ptr.vmem [resolvable:$true] %s30
      %36 = dma.hbm_to_vmem [thread:$0]  %s1, 256, %s31, [#allocation6], 128, 128, 8
    $region9: #{tpu_custom_call.1} parent=1 // pred_fallthru
      _
    // Predicated region
    $region10: #{tpu_custom_call.1} parent=1 // pred_check
      _
    $region11: #{tpu_custom_call.1} parent=1 // pred_check_branch
      %38 = sbr.rel (0) target = $region13
    $region12: #{tpu_custom_call.1} parent=1 // pred_region
      _
    $region13: #{tpu_custom_call.1} parent=1 // pred_fallthru
      _
    // Predicated region
    $region14: #{tpu_custom_call.1} parent=1 // pred_check
      _
    $region15: #{tpu_custom_call.1} parent=1 // pred_check_branch
      %40 = sbr.rel (0) target = $region17
    $region16: #{tpu_custom_call.1} parent=1 // pred_region
      _
    $region17: #{tpu_custom_call.1} parent=1 // pred_fallthru
      _
    // Predicated region
    $region18: #{tpu_custom_call.1} parent=1 // pred_check
      _
    $region19: #{tpu_custom_call.1} parent=1 // pred_check_branch
      %42 = sbr.rel (0) target = $region21
    $region20: #{tpu_custom_call.1} parent=1 // pred_region
      _
    $region21: #{tpu_custom_call.1} parent=1 // pred_fallthru
      _
    // Predicated region
    $region22: #{tpu_custom_call.1} parent=1 // pred_check
      _
    $region23: #{tpu_custom_call.1} parent=1 // pred_check_branch
      %44 = sbr.rel (0) target = $region25
    $region24: #{tpu_custom_call.1} parent=1 // pred_region
      %45 = dma.done [#allocation3], 256
    $region25: #{tpu_custom_call.1} parent=1 // pred_fallthru
      _
    // Predicated region
    $region26: #{tpu_custom_call.1} parent=1 // pred_check
      _
    $region27: #{tpu_custom_call.1} parent=1 // pred_check_branch
      %47 = sbr.rel (0) target = $region29
    $region28: #{tpu_custom_call.1} parent=1 // pred_region
      %48 = dma.done [#allocation6], 256
    $region29: #{tpu_custom_call.1} parent=1 // pred_fallthru
      _
    %v49 = vld [vmem:[#allocation2] sm:$0xff]
    %v50 = vld [vmem:[#allocation2 + $0x8] sm:$0xff]
    %v51 = vld [vmem:[#allocation5] sm:$0xff]
    %v52 = vld [vmem:[#allocation5 + $0x8] sm:$0x3]
    %v53 = vld [vmem:[%s2] sm:$0x1]
    %v55 = vlaneseq
    %v56 = vshrl.u32 %v55, 7
    %v57 = vsub.s32 0, %v56
    %v58 = vrot.slane %v53, %v57
    %vm60 = vcmask 80896
    %v62 = vsel %vm60, %v49, 0
    %v65 = vsel %vm60, %v50, 0
    %vm67 = vcmask 1041408
    %v69 = vsel %vm67, %v52, 0
    %71 = vmatprep.subr.mxu0 0.0
    %72 = vmatpush1.msra.mxu0 %v51
    %73 = vmatprep.subr.mxu0 0.0
    %74 = vmatpush1.msra.mxu0 %v69
    %75 = vmatprep.subr.mxu0 0.0
    %76 = vmatpush1.msra.mxu0 0.0
    %77 = vmatprep.subr.mxu0 0.0
    %78 = vmatpush1.msra.mxu0 0.0
    %79 = vmatprep.subr.mxu0 0.0
    %80 = vmatpush1.msra.mxu0 0.0
    %81 = vmatprep.subr.mxu0 0.0
    %82 = vmatpush1.msra.mxu0 0.0
    %83 = vmatprep.subr.mxu0 0.0
    %84 = vmatpush1.msra.mxu0 0.0
    %85 = vmatprep.subr.mxu0 0.0
    %86 = vmatpush1.msra.mxu0 0.0
    %87 = vmatprep.subr.mxu0 0.0
    %88 = vmatpush1.msra.mxu0 0.0
    %89 = vmatprep.subr.mxu0 0.0
    %90 = vmatpush1.msra.mxu0 0.0
    %91 = vmatprep.subr.mxu0 0.0
    %92 = vmatpush1.msra.mxu0 0.0
    %93 = vmatprep.subr.mxu0 0.0
    %94 = vmatpush1.msra.mxu0 0.0
    %95 = vmatprep.subr.mxu0 0.0
    %96 = vmatpush1.msra.mxu0 0.0
    %97 = vmatprep.subr.mxu0 0.0
    %98 = vmatpush1.msra.mxu0 0.0
    %99 = vmatprep.subr.mxu0 0.0
    %100 = vmatpush1.msra.mxu0 0.0
    %101 = vmatprep.subr.mxu0 0.0
    %102 = vmatpush1.msra.mxu0 0.0
    %103 = vmatprep.subr.mxu0 0.0
    %104 = vmatpush1.msra.mxu0 0.0
    %105 = vmatprep.subr.mxu0 0.0
    %106 = vmatpush1.msra.mxu0 0.0
    %107 = vmatprep.subr.mxu0 0.0
    %108 = vmatpush1.msra.mxu0 0.0
    %109 = vmatprep.subr.mxu0 0.0
    %110 = vmatpush1.msra.mxu0 0.0
    %111 = vmatprep.subr.mxu0 0.0
    %112 = vmatpush1.msra.mxu0 0.0
    %113 = vmatprep.subr.mxu0 0.0
    %114 = vmatpush1.msra.mxu0 0.0
    %115 = vmatprep.subr.mxu0 0.0
    %116 = vmatpush1.msra.mxu0 0.0
    %117 = vmatprep.subr.mxu0 0.0
    %118 = vmatpush1.msra.mxu0 0.0
    %119 = vmatprep.subr.mxu0 0.0
    %120 = vmatpush1.msra.mxu0 0.0
    %121 = vmatprep.subr.mxu0 0.0
    %122 = vmatpush1.msra.mxu0 0.0
    %123 = vmatprep.subr.mxu0 0.0
    %124 = vmatpush1.msra.mxu0 0.0
    %125 = vmatprep.subr.mxu0 0.0
    %126 = vmatpush1.msra.mxu0 0.0
    %127 = vmatprep.subr.mxu0 0.0
    %128 = vmatpush1.msra.mxu0 0.0
    %129 = vmatprep.subr.mxu0 0.0
    %130 = vmatpush1.msra.mxu0 0.0
    %131 = vmatprep.subr.mxu0 0.0
    %132 = vmatpush1.msra.mxu0 0.0
    %133 = vmatprep.subr.mxu0 0.0
    %134 = vmatpush1.msra.mxu0 0.0
    %135 = vmatprep.mubr.f32.mxu0 0.0
    %136 = vmatmul.mubr.f32.gmra.mrb[0].mxu0 %v62
    %v137 = vpop.f32.mrb[0].mxu0
    %v138 = vadd.f32 %v58, %v137
    %v139 = vpop.f32.mrb[0].mxu0
    %140 = vmatprep.mubr.f32.mxu0 0.0
    %141 = vmatmul.mubr.f32.gmra.mrb[0].mxu0 %v65
    %v142 = vpop.f32.mrb[0].mxu0
    %v143 = vadd.f32 %v58, %v142
    %v144 = vpop.f32.mrb[0].mxu0
    %145 = vdwg.mxu0
    %vm146 = vcmask 261120
    %v147 = vsel %vm146, %v138, 0.0
    %148 = vadd.xlane.f32.xlu0 %v147
    %v149 = vpop.xlane.xlu0 %148
    %v150 = vsel %vm146, %v143, 0.0
    %151 = vadd.xlane.f32.xlu0 %v150
    %v152 = vpop.xlane.xlu0 %151
    %v153 = vrcp.pop 32.0
    %v154 = vmul.f32 %v149, %v153
    %v155 = vmul.f32 %v152, %v153
    %v156 = vsub.f32 %v138, %v154
    %v157 = vsub.f32 %v143, %v155
    %v158 = vmul.f32 %v156, %v156
    %v159 = vmul.f32 %v157, %v157
    %v160 = vsel %vm146, %v158, 0.0
    %161 = vadd.xlane.f32.xlu0 %v160
    %v162 = vpop.xlane.xlu0 %161
    %v163 = vsel %vm146, %v159, 0.0
    %164 = vadd.xlane.f32.xlu0 %v163
    %v165 = vpop.xlane.xlu0 %164
    %v166 = vmul.f32 %v162, %v153
    %v167 = vmul.f32 %v165, %v153
    %v168 = vadd.f32 %v166, 1e-05
    %v169 = vadd.f32 %v167, 1e-05
    %v170 = vrsqrt.pop %v168
    %v171 = vrsqrt.pop %v169
    %v172 = vmul.f32 %v156, %v170
    %v173 = vmul.f32 %v157, %v171
    %v174 = vld [vmem:[%s3] sm:$0x1]
    %v176 = vlaneseq
    %v177 = vshrl.u32 %v176, 7
    %v178 = vsub.s32 0, %v177
    %v179 = vrot.slane %v174, %v178
    %v181 = vmul.f32 %v172, %v179
    %v182 = vmul.f32 %v173, %v179
    %v183 = vld [vmem:[%s4] sm:$0x1]
    %v185 = vlaneseq
    %v186 = vshrl.u32 %v185, 7
    %v187 = vsub.s32 0, %v186
    %v188 = vrot.slane %v183, %v187
    %v190 = vadd.f32 %v181, %v188
    %v191 = vadd.f32 %v182, %v188
    %192 = vst.msk [vmem:[#allocation7] sm:$0xff] %vm146, %v190
    %193 = vst.msk [vmem:[#allocation7 + $0x8] sm:$0xff] %vm146, %v191
    // Predicated region
    $region30: #{tpu_custom_call.1} parent=1 // pred_check
      _
    $region31: #{tpu_custom_call.1} parent=1 // pred_check_branch
      %195 = sbr.rel (0) target = $region33
    $region32: #{tpu_custom_call.1} parent=1 // pred_region
      %s197 = ssub.s32 256, 256
      %198 = vsyncadd [#allocation4], %s197
      %s199 = sshll.u32 [#allocation7], 4
      %s200 = int_to_ptr.vmem [resolvable:$true] %s199
      %205 = dma.vmem_to_hbm [thread:$0]  %s200, 256, %s5, [#allocation4], 128, 128, 8
    $region33: #{tpu_custom_call.1} parent=1 // pred_fallthru
      _
    // Predicated region
    $region34: #{tpu_custom_call.1} parent=1 // pred_check
      _
    $region35: #{tpu_custom_call.1} parent=1 // pred_check_branch
      %207 = sbr.rel (0) target = $region37
    $region36: #{tpu_custom_call.1} parent=1 // pred_region
      %208 = dma.done [#allocation4], 256
    $region37: #{tpu_custom_call.1} parent=1 // pred_fallthru
      _
    %209 = vsyncpa [#allocation3], 1
    %210 = vsyncpa [#allocation6], 1
    %211 = vsyncpa [#allocation4], 1

</llo_original>
